<compile_context>
chip_gen: v7x
topology: tpu7x:2x2x1
jax: 0.10.0
libtpu: 0.0.40
codegen_flags: <defaults>
</compile_context>

<pallas_src>
import jax
import jax.numpy as jnp
from jax.experimental import pallas as pl
from jax.experimental.pallas import tpu as pltpu

# ---- module hyperparameters (from bing3.py) ----
CNN_K = 3
DEEP_HID = 64
DEEP_IN = 7
OUT_DIM = 2
WIDE_HID = 64
WIDE_IN = 1035
CONV_L = DEEP_IN - CNN_K + 1          # 5
HID2 = WIDE_HID + DEEP_HID            # 128 -> exactly one vreg of lanes


def _wide_deep_kernel(xw_ref, xd_ref, w1_ref, w2_ref, bh_ref, wd_ref, bd_ref, out_ref):
    # Fused hidden layer: columns 0..63 = wide Linear, columns 64..127 = folded deep path.
    h = jnp.dot(xw_ref[...], w1_ref[...], preferred_element_type=jnp.float32)       # (TB,128)
    h = h + jnp.dot(xd_ref[...], w2_ref[...], preferred_element_type=jnp.float32)   # (TB,128)
    h = jnp.maximum(h + bh_ref[...], 0.0)                                            # ReLU

    # 2-class softmax == sigmoid(z0 - z1): single N=1 matmul + elementwise epilogue
    # (no cross-lane reductions; sigmoid is bounded so padded garbage rows can't NaN).
    d = jnp.dot(h, wd_ref[...], preferred_element_type=jnp.float32) + bd_ref[...]   # (TB,1)
    p0 = jax.nn.sigmoid(d)
    lane = jax.lax.broadcasted_iota(jnp.int32, (d.shape[0], OUT_DIM), 1)
    out_ref[...] = jnp.where(lane == 0, p0, 1.0 - p0).astype(out_ref.dtype)


def _choose_batch_tile(batch, block_b, min_steps):
    """Pick batch tile: as large as allowed, multiple of 8 when < batch, and small enough
    that the grid has >= min_steps steps (pipelining + v7x dual-TC sharding)."""
    tb = min(block_b, batch)
    if tb < batch:
        tb = max(8, (tb // 8) * 8)
    if batch >= 8 * min_steps and pl.cdiv(batch, tb) < min_steps:
        tb = max(8, (pl.cdiv(batch, min_steps) // 8) * 8)
    return tb


def wide_deep_cnn(x_wide, x_deep, params, *, block_b=2048, min_grid_steps=4,
                  vmem_limit_bytes=48 * 1024 * 1024):
    """Forward pass.

    block_b=2048 fits every generation (incl. v7x's 64 MiB VMEM with the 48 MiB limit).
    On v5e/v6e (128 MiB physical VMEM) block_b=4096 with vmem_limit_bytes~=80 MiB is a
    further ~10% win for very large batches.
    """
    B = x_wide.shape[0]
    TB = _choose_batch_tile(B, block_b, min_grid_steps)
    grid = (pl.cdiv(B, TB),)

    xw = x_wide.astype(jnp.bfloat16)   # MXU-native, halves dominant HBM traffic
    xd = x_deep.astype(jnp.bfloat16)   # lane-sparse (B,7) input: bf16 halves DMA + VMEM pad

    operands = (xw, xd,
                params["W_hid_wide"], params["W_hid_deep"], params["b_hid"],
                params["W_out_diff"], params["b_out_diff"])
    flops = 2 * B * (WIDE_IN * HID2 + DEEP_IN * HID2 + HID2 * 1)
    bytes_accessed = (sum(a.size * a.dtype.itemsize for a in operands)
                      + B * OUT_DIM * 4)

    return pl.pallas_call(
        _wide_deep_kernel,
        out_shape=jax.ShapeDtypeStruct((B, OUT_DIM), jnp.float32),
        grid=grid,
        in_specs=[
            pl.BlockSpec((TB, WIDE_IN), lambda i: (i, 0)),       # x_wide tile (pipelined)
            pl.BlockSpec((TB, DEEP_IN), lambda i: (i, 0)),       # x_deep tile
            pl.BlockSpec((WIDE_IN, HID2), lambda i: (0, 0)),     # wide weight (VMEM-resident)
            pl.BlockSpec((DEEP_IN, HID2), lambda i: (0, 0)),     # folded deep weight (resident)
            pl.BlockSpec((1, HID2), lambda i: (0, 0)),           # fused hidden bias
            pl.BlockSpec((HID2, 1), lambda i: (0, 0)),           # output weight difference
            pl.BlockSpec((1, 1), lambda i: (0, 0)),              # output bias difference
        ],
        out_specs=pl.BlockSpec((TB, OUT_DIM), lambda i: (i, 0)),
        compiler_params=pltpu.CompilerParams(
            dimension_semantics=("parallel",),                   # batch axis -> both TCs on v7x
            vmem_limit_bytes=vmem_limit_bytes),
        cost_estimate=pl.CostEstimate(flops=flops,
                                      transcendentals=B,
                                      bytes_accessed=bytes_accessed),
    )(*operands)


def init_params(key, *, wide_dtype=jnp.bfloat16, deep_dtype=jnp.bfloat16):
    """Deterministic synthetic params with the same shapes as the torch module, pre-fused."""
    ks = jax.random.split(key, 8)
    # torch-layout weights
    w_wide = jax.random.normal(ks[0], (WIDE_HID, WIDE_IN), jnp.float32) * 0.02
    b_wide = jax.random.normal(ks[1], (WIDE_HID,), jnp.float32) * 0.02
    w_conv = jax.random.normal(ks[2], (DEEP_HID, 1, CNN_K), jnp.float32) * 0.1
    b_conv = jax.random.normal(ks[3], (DEEP_HID,), jnp.float32) * 0.1
    w_fc = jax.random.normal(ks[4], (DEEP_HID, DEEP_HID * CONV_L), jnp.float32) * 0.05
    b_fc = jax.random.normal(ks[5], (DEEP_HID,), jnp.float32) * 0.05
    w_out = jax.random.normal(ks[6], (OUT_DIM, WIDE_HID + DEEP_HID), jnp.float32) * 0.05
    b_out = jax.random.normal(ks[7], (OUT_DIM,), jnp.float32) * 0.05

    # ---- fold the deep path (conv -> channel-major flatten -> FC) into one affine map ----
    # (torch module applies NO nonlinearity between conv and fc, so folding is exact)
    wc = w_conv[:, 0, :]                                             # (64, 3)

    def deep_pre(xd):                                                # (N,7) -> (N,64), no ReLU
        conv = jnp.stack([xd[:, p:p + CNN_K] @ wc.T + b_conv for p in range(CONV_L)],
                         axis=-1)                                    # (N, 64, 5) channel-major
        flat = conv.reshape(xd.shape[0], DEEP_HID * CONV_L)
        return flat @ w_fc.T + b_fc

    b_deep_eff = deep_pre(jnp.zeros((1, DEEP_IN), jnp.float32))                  # (1, 64)
    w_deep_eff = deep_pre(jnp.eye(DEEP_IN, dtype=jnp.float32)) - b_deep_eff      # (7, 64)

    # ---- fuse wide + deep into one 128-wide hidden layer (disjoint column halves) ----
    w_hid_wide = jnp.zeros((WIDE_IN, HID2), jnp.float32).at[:, :WIDE_HID].set(w_wide.T)
    w_hid_deep = jnp.zeros((DEEP_IN, HID2), jnp.float32).at[:, WIDE_HID:].set(w_deep_eff)
    b_hid = jnp.concatenate([b_wide, b_deep_eff[0]])[None, :]                    # (1, 128)

    # ---- output head as a single logit-difference column (2-class softmax == sigmoid) ----
    w_out_diff = (w_out[0] - w_out[1])[:, None]                                  # (128, 1)
    b_out_diff = (b_out[0] - b_out[1]).reshape(1, 1)                             # (1, 1)

    return {
        "W_hid_wide": w_hid_wide.astype(wide_dtype),   # (1035, 128) bf16
        "W_hid_deep": w_hid_deep.astype(deep_dtype),   # (7, 128)    bf16
        "b_hid": b_hid,                                # (1, 128)    f32
        "W_out_diff": w_out_diff,                      # (128, 1)    f32
        "b_out_diff": b_out_diff,                      # (1, 1)      f32
        # torch-layout copies for the pure-JAX reference
        "_torch": dict(b_wide=b_wide, wc=wc, b_conv=b_conv,
                       w_fc=w_fc, b_fc=b_fc, w_out=w_out, b_out=b_out),
    }


def ref_forward(x_wide, x_deep, params):
    """Pure-JAX mirror of the PyTorch forward (conv -> channel-major flatten -> fc),
    evaluated on the same bf16-rounded inputs / wide weight the kernel consumes."""
    t = params["_torch"]
    xw = x_wide.astype(jnp.bfloat16).astype(jnp.float32)
    xd = x_deep.astype(jnp.bfloat16).astype(jnp.float32)
    ww = params["W_hid_wide"][:, :WIDE_HID].astype(jnp.float32)      # bf16-rounded wide weight
    wide = jax.nn.relu(xw @ ww + t["b_wide"])
    conv = jnp.stack([xd[:, p:p + CNN_K] @ t["wc"].T + t["b_conv"] for p in range(CONV_L)],
                     axis=-1)                                        # (B, 64, 5)
    flat = conv.reshape(xd.shape[0], DEEP_HID * CONV_L)              # channel-major, like .view()
    deep = jax.nn.relu(flat @ t["w_fc"].T + t["b_fc"])
    out = jnp.concatenate([wide, deep], axis=1) @ t["w_out"].T + t["b_out"]
    return jax.nn.softmax(out, axis=1)


if __name__ == "__main__":
    key = jax.random.PRNGKey(0)
    k_in, k_p = jax.random.split(key)
    k_w, k_d = jax.random.split(k_in)

    B = 2
    x_wide = jax.random.normal(k_w, (B, WIDE_IN), jnp.float32).astype(jnp.bfloat16)
    x_deep = jax.random.normal(k_d, (B, DEEP_IN), jnp.float32)
    params = init_params(k_p)

    fwd = jax.jit(wide_deep_cnn,
                  static_argnames=("block_b", "min_grid_steps", "vmem_limit_bytes"))
    out = jax.block_until_ready(fwd(x_wide, x_deep, params))

    ref = ref_forward(x_wide, x_deep, params)
    assert out.shape == (B, OUT_DIM)
    assert jnp.allclose(jnp.sum(out, axis=1), 1.0, atol=1e-5)
    assert jnp.allclose(out, ref, atol=2e-3, rtol=2e-3), (out, ref)

    print("KERNEL_OK")
</pallas_src>

<mosaic_0001>
module attributes {stable_mosaic.version = 11 : i64} {
  func.func @_wide_deep_kernel(%arg0: i32, %arg1: memref<2x1035xbf16, #tpu.memory_space<vmem>>, %arg2: memref<2x7xbf16, #tpu.memory_space<vmem>>, %arg3: memref<1035x128xbf16, #tpu.memory_space<vmem>>, %arg4: memref<7x128xbf16, #tpu.memory_space<vmem>>, %arg5: memref<1x128xf32, #tpu.memory_space<vmem>>, %arg6: memref<128x1xf32, #tpu.memory_space<vmem>>, %arg7: memref<1x1xf32, #tpu.memory_space<vmem>>, %arg8: memref<2x2xf32, #tpu.memory_space<vmem>>) attributes {dimension_semantics = [#tpu.dimension_semantics<parallel>], iteration_bounds = array<i64: 1>, scalar_prefetch = 0 : i64, scratch_operands = 0 : i64, tpu.core_type = #tpu.core_type<tc>, window_params = [{transform_indices = @transform_0, window_bounds = array<i64: 2, 1035>}, {transform_indices = @transform_1, window_bounds = array<i64: 2, 7>}, {pipeline_mode = #tpu.pipeline_mode<synchronous>, transform_indices = @transform_2, window_bounds = array<i64: 1035, 128>}, {pipeline_mode = #tpu.pipeline_mode<synchronous>, transform_indices = @transform_3, window_bounds = array<i64: 7, 128>}, {pipeline_mode = #tpu.pipeline_mode<synchronous>, transform_indices = @transform_4, window_bounds = array<i64: 1, 128>}, {pipeline_mode = #tpu.pipeline_mode<synchronous>, transform_indices = @transform_5, window_bounds = array<i64: 128, 1>}, {pipeline_mode = #tpu.pipeline_mode<synchronous>, transform_indices = @transform_6, window_bounds = array<i64: 1, 1>}, {transform_indices = @transform_7, window_bounds = array<i64: 2, 2>}]} {
    %c0 = arith.constant 0 : index
    %c0_0 = arith.constant 0 : index
    %0 = vector.load %arg1[%c0, %c0_0] : memref<2x1035xbf16, #tpu.memory_space<vmem>>, vector<2x1035xbf16>
    %c0_1 = arith.constant 0 : index
    %c0_2 = arith.constant 0 : index
    %1 = vector.load %arg3[%c0_1, %c0_2] : memref<1035x128xbf16, #tpu.memory_space<vmem>>, vector<1035x128xbf16>
    %cst = arith.constant dense<0.000000e+00> : vector<2x128xf32>
    %2 = tpu.matmul %0, %1, %cst {dimension_numbers = #tpu.dot_dimension_numbers<[1], [0], [0], [1], [0, 0, 1, 1], [], []>} : vector<2x1035xbf16>, vector<1035x128xbf16>, vector<2x128xf32> -> vector<2x128xf32>
    %c0_3 = arith.constant 0 : index
    %c0_4 = arith.constant 0 : index
    %3 = vector.load %arg2[%c0_3, %c0_4] : memref<2x7xbf16, #tpu.memory_space<vmem>>, vector<2x7xbf16>
    %c0_5 = arith.constant 0 : index
    %c0_6 = arith.constant 0 : index
    %4 = vector.load %arg4[%c0_5, %c0_6] : memref<7x128xbf16, #tpu.memory_space<vmem>>, vector<7x128xbf16>
    %cst_7 = arith.constant dense<0.000000e+00> : vector<2x128xf32>
    %5 = tpu.matmul %3, %4, %cst_7 {dimension_numbers = #tpu.dot_dimension_numbers<[1], [0], [0], [1], [0, 0, 1, 1], [], []>} : vector<2x7xbf16>, vector<7x128xbf16>, vector<2x128xf32> -> vector<2x128xf32>
    %6 = arith.addf %2, %5 : vector<2x128xf32>
    %c0_8 = arith.constant 0 : index
    %c0_9 = arith.constant 0 : index
    %7 = vector.load %arg5[%c0_8, %c0_9] : memref<1x128xf32, #tpu.memory_space<vmem>>, vector<1x128xf32>
    %8 = vector.broadcast %7 : vector<1x128xf32> to vector<2x128xf32>
    %9 = arith.addf %6, %8 : vector<2x128xf32>
    %cst_10 = arith.constant 0.000000e+00 : f32
    %10 = vector.broadcast %cst_10 : f32 to vector<2x128xf32>
    %11 = arith.maximumf %9, %10 : vector<2x128xf32>
    %c0_11 = arith.constant 0 : index
    %c0_12 = arith.constant 0 : index
    %12 = vector.load %arg6[%c0_11, %c0_12] : memref<128x1xf32, #tpu.memory_space<vmem>>, vector<128x1xf32>
    %cst_13 = arith.constant dense<0.000000e+00> : vector<2x1xf32>
    %13 = tpu.matmul %11, %12, %cst_13 {dimension_numbers = #tpu.dot_dimension_numbers<[1], [0], [0], [1], [0, 0, 1, 1], [], []>} : vector<2x128xf32>, vector<128x1xf32>, vector<2x1xf32> -> vector<2x1xf32>
    %c0_14 = arith.constant 0 : index
    %c0_15 = arith.constant 0 : index
    %14 = vector.load %arg7[%c0_14, %c0_15] : memref<1x1xf32, #tpu.memory_space<vmem>>, vector<1x1xf32>
    %15 = vector.broadcast %14 : vector<1x1xf32> to vector<2x1xf32>
    %16 = arith.addf %13, %15 : vector<2x1xf32>
    %17 = arith.negf %16 : vector<2x1xf32>
    %18 = math.exp %17 : vector<2x1xf32>
    %cst_16 = arith.constant 1.000000e+00 : f32
    %19 = vector.broadcast %cst_16 : f32 to vector<2x1xf32>
    %20 = arith.addf %19, %18 : vector<2x1xf32>
    %21 = arith.divf %19, %20 : vector<2x1xf32>
    %22 = tpu.iota {dimensions = array<i32: 1>} : vector<2x2xi32>
    %c0_i32 = arith.constant 0 : i32
    %23 = vector.broadcast %c0_i32 : i32 to vector<2x2xi32>
    %24 = arith.cmpi eq, %22, %23 : vector<2x2xi32>
    %cst_17 = arith.constant 1.000000e+00 : f32
    %25 = vector.broadcast %cst_17 : f32 to vector<2x1xf32>
    %26 = arith.subf %25, %21 : vector<2x1xf32>
    %27 = vector.shape_cast %21 : vector<2x1xf32> to vector<2x1xf32>
    %28 = vector.broadcast %27 : vector<2x1xf32> to vector<2x2xf32>
    %29 = vector.shape_cast %26 : vector<2x1xf32> to vector<2x1xf32>
    %30 = vector.broadcast %29 : vector<2x1xf32> to vector<2x2xf32>
    %31 = arith.select %24, %28, %30 : vector<2x2xi1>, vector<2x2xf32>
    %c0_18 = arith.constant 0 : index
    %c0_19 = arith.constant 0 : index
    %32 = vector.load %arg8[%c0_18, %c0_19] : memref<2x2xf32, #tpu.memory_space<vmem>>, vector<2x2xf32>
    tpu.vector_store %arg8[%c0_18, %c0_19], %31 {strides = array<i32>} : memref<2x2xf32, #tpu.memory_space<vmem>>, vector<2x2xf32>,
    return
  }
  func.func @transform_0(%arg0: i32) -> (i32, i32) {
    %c0_i32 = arith.constant 0 : i32
    %c0_i32_0 = arith.constant 0 : i32
    return %arg0, %c0_i32 : i32, i32
  }
  func.func @transform_1(%arg0: i32) -> (i32, i32) {
    %c0_i32 = arith.constant 0 : i32
    %c0_i32_0 = arith.constant 0 : i32
    return %arg0, %c0_i32 : i32, i32
  }
  func.func @transform_2(%arg0: i32) -> (i32, i32) {
    %c0_i32 = arith.constant 0 : i32
    %c0_i32_0 = arith.constant 0 : i32
    %c0_i32_1 = arith.constant 0 : i32
    return %c0_i32, %c0_i32_0 : i32, i32
  }
  func.func @transform_3(%arg0: i32) -> (i32, i32) {
    %c0_i32 = arith.constant 0 : i32
    %c0_i32_0 = arith.constant 0 : i32
    %c0_i32_1 = arith.constant 0 : i32
    return %c0_i32, %c0_i32_0 : i32, i32
  }
  func.func @transform_4(%arg0: i32) -> (i32, i32) {
    %c0_i32 = arith.constant 0 : i32
    %c0_i32_0 = arith.constant 0 : i32
    %c0_i32_1 = arith.constant 0 : i32
    return %c0_i32, %c0_i32_0 : i32, i32
  }
  func.func @transform_5(%arg0: i32) -> (i32, i32) {
    %c0_i32 = arith.constant 0 : i32
    %c0_i32_0 = arith.constant 0 : i32
    %c0_i32_1 = arith.constant 0 : i32
    return %c0_i32, %c0_i32_0 : i32, i32
  }
  func.func @transform_6(%arg0: i32) -> (i32, i32) {
    %c0_i32 = arith.constant 0 : i32
    %c0_i32_0 = arith.constant 0 : i32
    %c0_i32_1 = arith.constant 0 : i32
    return %c0_i32, %c0_i32_0 : i32, i32
  }
  func.func @transform_7(%arg0: i32) -> (i32, i32) {
    %c0_i32 = arith.constant 0 : i32
    %c0_i32_0 = arith.constant 0 : i32
    return %arg0, %c0_i32 : i32, i32
  }
}

</mosaic_0001>

<llo_original>
// kernel: wide_deep_cnn.1
$region0: #{wide_deep_cnn.1}
  #allocation0 [shape = 'u32[]', space=smem, size = 0x4, offset = 0x4, fixed_abs, tag = 'smem constant byte address 0x4 - core index']
  #allocation1 [shape = 'u32[144,128]{1,0:T(1,128)}', space=vmem, size = 0x12000, scoped, tag = 'internal scratch']
  #allocation2 [shape = 'f32[1,1]{1,0:T(1,128)S(1)}', space=vmem, size = 0x200, scoped, tag = 'scoped memory for wide_deep_cnn.1']
  %s0 = inlined_call_operand.vmem [shape: bf16[2,1035], index: 0, kind: input, shape index: {}]
  %s1 = inlined_call_operand.vmem [shape: bf16[2,7], index: 1, kind: input, shape index: {}]
  %s2 = inlined_call_operand.hbm [shape: bf16[1035,128], index: 2, kind: input, shape index: {}]
  %s3 = inlined_call_operand.vmem [shape: bf16[7,128], index: 3, kind: input, shape index: {}]
  %s4 = inlined_call_operand.vmem [shape: f32[1,128], index: 4, kind: input, shape index: {}]
  %s5 = inlined_call_operand.vmem [shape: f32[128,1], index: 5, kind: input, shape index: {}]
  %s6 = inlined_call_operand.<no memory space> [shape: f32[1,1], index: 6, kind: input, shape index: {}]
  %s7 = inlined_call_operand.hbm [shape: f32[2,2], index: 7, kind: output, shape index: {}]
  %s8 = sld [smem:[#allocation0]]
  $region42: #{wide_deep_cnn.1} parent=0
    _
  %s10 = ssub.s32 1, %s8
  %s11 = scalar_select 0, %s10, %s8
  %v12 = vstv %s6
  %13 = vst [vmem:[#allocation2] sm:$0x1] %v12
  $region1: #{wide_deep_cnn.1} parent=0
    #allocation3 [shape = 'u8[266240]{0}', space=vmem, size = 0x41000, scoped, tag = 'input window, operand 2, single buffered']
    #allocation4 [shape = 's32[1]{0}', space=sflag, size = 0x4, scoped, tag = 'scoped memory for wide_deep_cnn.1']
    #allocation5 [shape = 's32[1]{0}', space=sflag, size = 0x4, scoped, tag = 'scoped memory for wide_deep_cnn.1']
    #allocation6 [shape = 'u8[1024]{0}', space=vmem, size = 0x400, scoped, tag = 'output window, operand 0, single buffered']
    %14 = vsyncpa [#allocation4], 0
    %15 = vsyncpa [#allocation5], 0
    // Predicated region
    $region2: #{wide_deep_cnn.1} parent=1 // pred_check
      _
    $region3: #{wide_deep_cnn.1} parent=1 // pred_check_branch
      %17 = sbr.rel (0) target = $region5
    $region4: #{wide_deep_cnn.1} parent=1 // pred_region
      _
    $region5: #{wide_deep_cnn.1} parent=1 // pred_fallthru
      _
    // Predicated region
    $region6: #{wide_deep_cnn.1} parent=1 // pred_check
      _
    $region7: #{wide_deep_cnn.1} parent=1 // pred_check_branch
      %19 = sbr.rel (0) target = $region9
    $region8: #{wide_deep_cnn.1} parent=1 // pred_region
      _
    $region9: #{wide_deep_cnn.1} parent=1 // pred_fallthru
      _
    // Predicated region
    $region10: #{wide_deep_cnn.1} parent=1 // pred_check
      _
    $region11: #{wide_deep_cnn.1} parent=1 // pred_check_branch
      %21 = sbr.rel (0) target = $region13
    $region12: #{wide_deep_cnn.1} parent=1 // pred_region
      %s23 = ssub.s32 8320, 8320
      %24 = vsyncadd [#allocation4], %s23
      %s25 = sshll.u32 [#allocation3], 4
      %s26 = int_to_ptr.vmem [resolvable:$true] %s25
      %31 = dma.hbm_to_vmem [thread:$0]  %s2, 8320, %s26, [#allocation4], 64, 64, 4
    $region13: #{wide_deep_cnn.1} parent=1 // pred_fallthru
      _
    // Predicated region
    $region14: #{wide_deep_cnn.1} parent=1 // pred_check
      _
    $region15: #{wide_deep_cnn.1} parent=1 // pred_check_branch
      %33 = sbr.rel (0) target = $region17
    $region16: #{wide_deep_cnn.1} parent=1 // pred_region
      _
    $region17: #{wide_deep_cnn.1} parent=1 // pred_fallthru
      _
    // Predicated region
    $region18: #{wide_deep_cnn.1} parent=1 // pred_check
      _
    $region19: #{wide_deep_cnn.1} parent=1 // pred_check_branch
      %35 = sbr.rel (0) target = $region21
    $region20: #{wide_deep_cnn.1} parent=1 // pred_region
      _
    $region21: #{wide_deep_cnn.1} parent=1 // pred_fallthru
      _
    // Predicated region
    $region22: #{wide_deep_cnn.1} parent=1 // pred_check
      _
    $region23: #{wide_deep_cnn.1} parent=1 // pred_check_branch
      %37 = sbr.rel (0) target = $region25
    $region24: #{wide_deep_cnn.1} parent=1 // pred_region
      _
    $region25: #{wide_deep_cnn.1} parent=1 // pred_fallthru
      _
    // Predicated region
    $region26: #{wide_deep_cnn.1} parent=1 // pred_check
      _
    $region27: #{wide_deep_cnn.1} parent=1 // pred_check_branch
      %39 = sbr.rel (0) target = $region29
    $region28: #{wide_deep_cnn.1} parent=1 // pred_region
      _
    $region29: #{wide_deep_cnn.1} parent=1 // pred_fallthru
      _
    // Predicated region
    $region30: #{wide_deep_cnn.1} parent=1 // pred_check
      _
    $region31: #{wide_deep_cnn.1} parent=1 // pred_check_branch
      %41 = sbr.rel (0) target = $region33
    $region32: #{wide_deep_cnn.1} parent=1 // pred_region
      %42 = dma.done [#allocation4], 8320
    $region33: #{wide_deep_cnn.1} parent=1 // pred_fallthru
      _
    %v44 = vld [vmem:[%s0] sm:$0xff]
    %v45 = vld [vmem:[%s0 + $0x8] sm:$0x1]
    %v46 = vld [vmem:[#allocation3] sm:$0xf]
    %v47 = vld [vmem:[#allocation3 + $0x4] sm:$0xf]
    %v48 = vld [vmem:[#allocation3 + $0x8] sm:$0xf]
    %v49 = vld [vmem:[#allocation3 + $0xc] sm:$0xf]
    %v50 = vld [vmem:[#allocation3 + $0x10] sm:$0xf]
    %v51 = vld [vmem:[#allocation3 + $0x14] sm:$0xf]
    %v52 = vld [vmem:[#allocation3 + $0x18] sm:$0xf]
    %v53 = vld [vmem:[#allocation3 + $0x1c] sm:$0xf]
    %v54 = vld [vmem:[#allocation3 + $0x20] sm:$0xf]
    %v55 = vld [vmem:[#allocation3 + $0x24] sm:$0xf]
    %v56 = vld [vmem:[#allocation3 + $0x28] sm:$0xf]
    %v57 = vld [vmem:[#allocation3 + $0x2c] sm:$0xf]
    %v58 = vld [vmem:[#allocation3 + $0x30] sm:$0xf]
    %v59 = vld [vmem:[#allocation3 + $0x34] sm:$0xf]
    %v60 = vld [vmem:[#allocation3 + $0x38] sm:$0xf]
    %v61 = vld [vmem:[#allocation3 + $0x3c] sm:$0xf]
    %v62 = vld [vmem:[#allocation3 + $0x40] sm:$0xf]
    %v63 = vld [vmem:[#allocation3 + $0x44] sm:$0xf]
    %v64 = vld [vmem:[#allocation3 + $0x48] sm:$0xf]
    %v65 = vld [vmem:[#allocation3 + $0x4c] sm:$0xf]
    %v66 = vld [vmem:[#allocation3 + $0x50] sm:$0xf]
    %v67 = vld [vmem:[#allocation3 + $0x54] sm:$0xf]
    %v68 = vld [vmem:[#allocation3 + $0x58] sm:$0xf]
    %v69 = vld [vmem:[#allocation3 + $0x5c] sm:$0xf]
    %v70 = vld [vmem:[#allocation3 + $0x60] sm:$0xf]
    %v71 = vld [vmem:[#allocation3 + $0x64] sm:$0xf]
    %v72 = vld [vmem:[#allocation3 + $0x68] sm:$0xf]
    %v73 = vld [vmem:[#allocation3 + $0x6c] sm:$0xf]
    %v74 = vld [vmem:[#allocation3 + $0x70] sm:$0xf]
    %v75 = vld [vmem:[#allocation3 + $0x74] sm:$0xf]
    %v76 = vld [vmem:[#allocation3 + $0x78] sm:$0xf]
    %v77 = vld [vmem:[#allocation3 + $0x7c] sm:$0xf]
    %v78 = vld [vmem:[#allocation3 + $0x80] sm:$0xf]
    %v79 = vld [vmem:[#allocation3 + $0x84] sm:$0xf]
    %v80 = vld [vmem:[#allocation3 + $0x88] sm:$0xf]
    %v81 = vld [vmem:[#allocation3 + $0x8c] sm:$0xf]
    %v82 = vld [vmem:[#allocation3 + $0x90] sm:$0xf]
    %v83 = vld [vmem:[#allocation3 + $0x94] sm:$0xf]
    %v84 = vld [vmem:[#allocation3 + $0x98] sm:$0xf]
    %v85 = vld [vmem:[#allocation3 + $0x9c] sm:$0xf]
    %v86 = vld [vmem:[#allocation3 + $0xa0] sm:$0xf]
    %v87 = vld [vmem:[#allocation3 + $0xa4] sm:$0xf]
    %v88 = vld [vmem:[#allocation3 + $0xa8] sm:$0xf]
    %v89 = vld [vmem:[#allocation3 + $0xac] sm:$0xf]
    %v90 = vld [vmem:[#allocation3 + $0xb0] sm:$0xf]
    %v91 = vld [vmem:[#allocation3 + $0xb4] sm:$0xf]
    %v92 = vld [vmem:[#allocation3 + $0xb8] sm:$0xf]
    %v93 = vld [vmem:[#allocation3 + $0xbc] sm:$0xf]
    %v94 = vld [vmem:[#allocation3 + $0xc0] sm:$0xf]
    %v95 = vld [vmem:[#allocation3 + $0xc4] sm:$0xf]
    %v96 = vld [vmem:[#allocation3 + $0xc8] sm:$0xf]
    %v97 = vld [vmem:[#allocation3 + $0xcc] sm:$0xf]
    %v98 = vld [vmem:[#allocation3 + $0xd0] sm:$0xf]
    %v99 = vld [vmem:[#allocation3 + $0xd4] sm:$0xf]
    %v100 = vld [vmem:[#allocation3 + $0xd8] sm:$0xf]
    %v101 = vld [vmem:[#allocation3 + $0xdc] sm:$0xf]
    %v102 = vld [vmem:[#allocation3 + $0xe0] sm:$0xf]
    %v103 = vld [vmem:[#allocation3 + $0xe4] sm:$0xf]
    %v104 = vld [vmem:[#allocation3 + $0xe8] sm:$0xf]
    %v105 = vld [vmem:[#allocation3 + $0xec] sm:$0xf]
    %v106 = vld [vmem:[#allocation3 + $0xf0] sm:$0xf]
    %v107 = vld [vmem:[#allocation3 + $0xf4] sm:$0xf]
    %v108 = vld [vmem:[#allocation3 + $0xf8] sm:$0xf]
    %v109 = vld [vmem:[#allocation3 + $0xfc] sm:$0xf]
    %v110 = vld [vmem:[#allocation3 + $0x100] sm:$0xf]
    %v111 = vld [vmem:[#allocation3 + $0x104] sm:$0xf]
    %v112 = vld [vmem:[#allocation3 + $0x108] sm:$0xf]
    %v113 = vld [vmem:[#allocation3 + $0x10c] sm:$0xf]
    %v114 = vld [vmem:[#allocation3 + $0x110] sm:$0xf]
    %v115 = vld [vmem:[#allocation3 + $0x114] sm:$0xf]
    %v116 = vld [vmem:[#allocation3 + $0x118] sm:$0xf]
    %v117 = vld [vmem:[#allocation3 + $0x11c] sm:$0xf]
    %v118 = vld [vmem:[#allocation3 + $0x120] sm:$0xf]
    %v119 = vld [vmem:[#allocation3 + $0x124] sm:$0xf]
    %v120 = vld [vmem:[#allocation3 + $0x128] sm:$0xf]
    %v121 = vld [vmem:[#allocation3 + $0x12c] sm:$0xf]
    %v122 = vld [vmem:[#allocation3 + $0x130] sm:$0xf]
    %v123 = vld [vmem:[#allocation3 + $0x134] sm:$0xf]
    %v124 = vld [vmem:[#allocation3 + $0x138] sm:$0xf]
    %v125 = vld [vmem:[#allocation3 + $0x13c] sm:$0xf]
    %v126 = vld [vmem:[#allocation3 + $0x140] sm:$0xf]
    %v127 = vld [vmem:[#allocation3 + $0x144] sm:$0xf]
    %v128 = vld [vmem:[#allocation3 + $0x148] sm:$0xf]
    %v129 = vld [vmem:[#allocation3 + $0x14c] sm:$0xf]
    %v130 = vld [vmem:[#allocation3 + $0x150] sm:$0xf]
    %v131 = vld [vmem:[#allocation3 + $0x154] sm:$0xf]
    %v132 = vld [vmem:[#allocation3 + $0x158] sm:$0xf]
    %v133 = vld [vmem:[#allocation3 + $0x15c] sm:$0xf]
    %v134 = vld [vmem:[#allocation3 + $0x160] sm:$0xf]
    %v135 = vld [vmem:[#allocation3 + $0x164] sm:$0xf]
    %v136 = vld [vmem:[#allocation3 + $0x168] sm:$0xf]
    %v137 = vld [vmem:[#allocation3 + $0x16c] sm:$0xf]
    %v138 = vld [vmem:[#allocation3 + $0x170] sm:$0xf]
    %v139 = vld [vmem:[#allocation3 + $0x174] sm:$0xf]
    %v140 = vld [vmem:[#allocation3 + $0x178] sm:$0xf]
    %v141 = vld [vmem:[#allocation3 + $0x17c] sm:$0xf]
    %v142 = vld [vmem:[#allocation3 + $0x180] sm:$0xf]
    %v143 = vld [vmem:[#allocation3 + $0x184] sm:$0xf]
    %v144 = vld [vmem:[#allocation3 + $0x188] sm:$0xf]
    %v145 = vld [vmem:[#allocation3 + $0x18c] sm:$0xf]
    %v146 = vld [vmem:[#allocation3 + $0x190] sm:$0xf]
    %v147 = vld [vmem:[#allocation3 + $0x194] sm:$0xf]
    %v148 = vld [vmem:[#allocation3 + $0x198] sm:$0xf]
    %v149 = vld [vmem:[#allocation3 + $0x19c] sm:$0xf]
    %v150 = vld [vmem:[#allocation3 + $0x1a0] sm:$0xf]
    %v151 = vld [vmem:[#allocation3 + $0x1a4] sm:$0xf]
    %v152 = vld [vmem:[#allocation3 + $0x1a8] sm:$0xf]
    %v153 = vld [vmem:[#allocation3 + $0x1ac] sm:$0xf]
    %v154 = vld [vmem:[#allocation3 + $0x1b0] sm:$0xf]
    %v155 = vld [vmem:[#allocation3 + $0x1b4] sm:$0xf]
    %v156 = vld [vmem:[#allocation3 + $0x1b8] sm:$0xf]
    %v157 = vld [vmem:[#allocation3 + $0x1bc] sm:$0xf]
    %v158 = vld [vmem:[#allocation3 + $0x1c0] sm:$0xf]
    %v159 = vld [vmem:[#allocation3 + $0x1c4] sm:$0xf]
    %v160 = vld [vmem:[#allocation3 + $0x1c8] sm:$0xf]
    %v161 = vld [vmem:[#allocation3 + $0x1cc] sm:$0xf]
    %v162 = vld [vmem:[#allocation3 + $0x1d0] sm:$0xf]
    %v163 = vld [vmem:[#allocation3 + $0x1d4] sm:$0xf]
    %v164 = vld [vmem:[#allocation3 + $0x1d8] sm:$0xf]
    %v165 = vld [vmem:[#allocation3 + $0x1dc] sm:$0xf]
    %v166 = vld [vmem:[#allocation3 + $0x1e0] sm:$0xf]
    %v167 = vld [vmem:[#allocation3 + $0x1e4] sm:$0xf]
    %v168 = vld [vmem:[#allocation3 + $0x1e8] sm:$0xf]
    %v169 = vld [vmem:[#allocation3 + $0x1ec] sm:$0xf]
    %v170 = vld [vmem:[#allocation3 + $0x1f0] sm:$0xf]
    %v171 = vld [vmem:[#allocation3 + $0x1f4] sm:$0xf]
    %v172 = vld [vmem:[#allocation3 + $0x1f8] sm:$0xf]
    %v173 = vld [vmem:[#allocation3 + $0x1fc] sm:$0xf]
    %v174 = vld [vmem:[#allocation3 + $0x200] sm:$0xf]
    %v175 = vld [vmem:[#allocation3 + $0x204] sm:$0x3]
    %v176 = vld [vmem:[%s1] sm:$0x1]
    %v177 = vld [vmem:[%s3] sm:$0xf]
    %vm178 = vcmask 56320
    %v180 = vsel %vm178, %v176, 0
    %vm182 = vcmask 1042432
    %vm183 = vcmask 1043456
    %v184 = vsel %vm182, 4294967295, 65535
    %v185 = vsel %vm183, %v184, 0
    %v187 = vand.u32 %v177, %v185
    %189 = vmatprep.subr.bf16.mxu0 0
    %190 = vmatpush1.bf16.msra.mxu0 %v187
    %191 = vmatprep.subr.bf16.mxu0 0
    %192 = vmatpush1.bf16.msra.mxu0 0
    %193 = vmatprep.subr.bf16.mxu0 0
    %194 = vmatpush1.bf16.msra.mxu0 0
    %195 = vmatprep.subr.bf16.mxu0 0
    %196 = vmatpush1.bf16.msra.mxu0 0
    %197 = vmatprep.subr.bf16.mxu0 0
    %198 = vmatpush1.bf16.msra.mxu0 0
    %199 = vmatprep.subr.bf16.mxu0 0
    %200 = vmatpush1.bf16.msra.mxu0 0
    %201 = vmatprep.subr.bf16.mxu0 0
    %202 = vmatpush1.bf16.msra.mxu0 0
    %203 = vmatprep.subr.bf16.mxu0 0
    %204 = vmatpush1.bf16.msra.mxu0 0
    %205 = vmatprep.subr.bf16.mxu0 0
    %206 = vmatpush1.bf16.msra.mxu0 0
    %207 = vmatprep.subr.bf16.mxu0 0
    %208 = vmatpush1.bf16.msra.mxu0 0
    %209 = vmatprep.subr.bf16.mxu0 0
    %210 = vmatpush1.bf16.msra.mxu0 0
    %211 = vmatprep.subr.bf16.mxu0 0
    %212 = vmatpush1.bf16.msra.mxu0 0
    %213 = vmatprep.subr.bf16.mxu0 0
    %214 = vmatpush1.bf16.msra.mxu0 0
    %215 = vmatprep.subr.bf16.mxu0 0
    %216 = vmatpush1.bf16.msra.mxu0 0
    %217 = vmatprep.subr.bf16.mxu0 0
    %218 = vmatpush1.bf16.msra.mxu0 0
    %219 = vmatprep.subr.bf16.mxu0 0
    %220 = vmatpush1.bf16.msra.mxu0 0
    %221 = vmatprep.mubr.bf16.mxu0 0
    %222 = vmatmul.mubr.bf16.gmra.mrb[0].mxu0 %v180
    %v223 = vpop.f32.mrb[0].mxu0
    %v224 = vadd.f32 0.0, %v223
    %v225 = vpop.f32.mrb[0].mxu0
    %v226 = vpop.f32.mrb[0].mxu0
    %v227 = vpop.f32.mrb[0].mxu0
    %228 = vdwg.mxu0
    %v231 = vcombine.high %v44, %v44
    %v233 = vunpack.c.l.s4 1966171168
    %v234 = vunpack.c.0.s8 %v233
    %v235 = vlaneseq
    %v236 = vshrl.u32 %v235, 7
    %v237 = vsub.s32 %v234, %v236
    %v238 = vrot.slane %v44, %v237
    %v240 = vunpack.c.l.s4 1966171168
    %v241 = vunpack.c.0.s8 %v240
    %v242 = vlaneseq
    %v243 = vshrl.u32 %v242, 7
    %v244 = vsub.s32 %v241, %v243
    %v245 = vrot.slane %v231, %v244
    %v246 = vcombine.high %v238, %v238
    %v247 = vcombine.high %v245, %v245
    %v249 = vunpack.c.l.s4 1966171168
    %v250 = vunpack.c.0.s8 %v249
    %v251 = vlaneseq
    %v252 = vshrl.u32 %v251, 7
    %v253 = vsub.s32 %v250, %v252
    %v254 = vrot.slane %v238, %v253
    %v256 = vunpack.c.l.s4 1966171168
    %v257 = vunpack.c.0.s8 %v256
    %v258 = vlaneseq
    %v259 = vshrl.u32 %v258, 7
    %v260 = vsub.s32 %v257, %v259
    %v261 = vrot.slane %v245, %v260
    %v263 = vunpack.c.l.s4 1966171168
    %v264 = vunpack.c.0.s8 %v263
    %v265 = vlaneseq
    %v266 = vshrl.u32 %v265, 7
    %v267 = vsub.s32 %v264, %v266
    %v268 = vrot.slane %v246, %v267
    %v270 = vunpack.c.l.s4 1966171168
    %v271 = vunpack.c.0.s8 %v270
    %v272 = vlaneseq
    %v273 = vshrl.u32 %v272, 7
    %v274 = vsub.s32 %v271, %v273
    %v275 = vrot.slane %v247, %v274
    %v276 = vcombine.high %v254, %v254
    %v277 = vcombine.high %v261, %v261
    %v278 = vcombine.high %v268, %v268
    %v279 = vcombine.high %v275, %v275
    %v281 = vunpack.c.l.s4 1966171168
    %v282 = vunpack.c.0.s8 %v281
    %v283 = vlaneseq
    %v284 = vshrl.u32 %v283, 7
    %v285 = vsub.s32 %v282, %v284
    %v286 = vrot.slane %v45, %v285
    %v288 = vunpack.c.l.s4 1966171168
    %v289 = vunpack.c.0.s8 %v288
    %v290 = vlaneseq
    %v291 = vshrl.u32 %v290, 7
    %v292 = vsub.s32 %v289, %v291
    %v293 = vrot.slane %v286, %v292
    %v432 = vunpack.c.l.b16 %v46
    %v433 = vunpack.c.l.b16 %v47
    %v434 = vunpack.c.l.b16 %v48
    %v435 = vunpack.c.l.b16 %v49
    %v436 = vunpack.c.l.b16 %v50
    %v437 = vunpack.c.l.b16 %v51
    %v438 = vunpack.c.l.b16 %v52
    %v439 = vunpack.c.l.b16 %v53
    %v440 = vunpack.c.l.b16 %v54
    %v441 = vunpack.c.l.b16 %v55
    %v442 = vunpack.c.l.b16 %v56
    %v443 = vunpack.c.l.b16 %v57
    %v444 = vunpack.c.l.b16 %v58
    %v445 = vunpack.c.l.b16 %v59
    %v446 = vunpack.c.l.b16 %v60
    %v447 = vunpack.c.l.b16 %v61
    %v448 = vunpack.c.l.b16 %v62
    %v449 = vunpack.c.l.b16 %v63
    %v450 = vunpack.c.l.b16 %v64
    %v451 = vunpack.c.l.b16 %v65
    %v452 = vunpack.c.l.b16 %v66
    %v453 = vunpack.c.l.b16 %v67
    %v454 = vunpack.c.l.b16 %v68
    %v455 = vunpack.c.l.b16 %v69
    %v456 = vunpack.c.l.b16 %v70
    %v457 = vunpack.c.l.b16 %v71
    %v458 = vunpack.c.l.b16 %v72
    %v459 = vunpack.c.l.b16 %v73
    %v460 = vunpack.c.l.b16 %v74
    %v461 = vunpack.c.l.b16 %v75
    %v462 = vunpack.c.l.b16 %v76
    %v463 = vunpack.c.l.b16 %v77
    %v464 = vunpack.c.l.b16 %v78
    %v465 = vunpack.c.l.b16 %v79
    %v466 = vunpack.c.l.b16 %v80
    %v467 = vunpack.c.l.b16 %v81
    %v468 = vunpack.c.l.b16 %v82
    %v469 = vunpack.c.l.b16 %v83
    %v470 = vunpack.c.l.b16 %v84
    %v471 = vunpack.c.l.b16 %v85
    %v472 = vunpack.c.l.b16 %v86
    %v473 = vunpack.c.l.b16 %v87
    %v474 = vunpack.c.l.b16 %v88
    %v475 = vunpack.c.l.b16 %v89
    %v476 = vunpack.c.l.b16 %v90
    %v477 = vunpack.c.l.b16 %v91
    %v478 = vunpack.c.l.b16 %v92
    %v479 = vunpack.c.l.b16 %v93
    %v480 = vunpack.c.l.b16 %v94
    %v481 = vunpack.c.l.b16 %v95
    %v482 = vunpack.c.l.b16 %v96
    %v483 = vunpack.c.l.b16 %v97
    %v484 = vunpack.c.l.b16 %v98
    %v485 = vunpack.c.l.b16 %v99
    %v486 = vunpack.c.l.b16 %v100
    %v487 = vunpack.c.l.b16 %v101
    %v488 = vunpack.c.l.b16 %v102
    %v489 = vunpack.c.l.b16 %v103
    %v490 = vunpack.c.l.b16 %v104
    %v491 = vunpack.c.l.b16 %v105
    %v492 = vunpack.c.l.b16 %v106
    %v493 = vunpack.c.l.b16 %v107
    %v494 = vunpack.c.l.b16 %v108
    %v495 = vunpack.c.l.b16 %v109
    %v496 = vunpack.c.l.b16 %v110
    %v497 = vunpack.c.l.b16 %v111
    %v498 = vunpack.c.l.b16 %v112
    %v499 = vunpack.c.l.b16 %v113
    %v500 = vunpack.c.l.b16 %v114
    %v501 = vunpack.c.l.b16 %v115
    %v502 = vunpack.c.l.b16 %v116
    %v503 = vunpack.c.l.b16 %v117
    %v504 = vunpack.c.l.b16 %v118
    %v505 = vunpack.c.l.b16 %v119
    %v506 = vunpack.c.l.b16 %v120
    %v507 = vunpack.c.l.b16 %v121
    %v508 = vunpack.c.l.b16 %v122
    %v509 = vunpack.c.l.b16 %v123
    %v510 = vunpack.c.l.b16 %v124
    %v511 = vunpack.c.l.b16 %v125
    %v512 = vunpack.c.l.b16 %v126
    %v513 = vunpack.c.l.b16 %v127
    %v514 = vunpack.c.l.b16 %v128
    %v515 = vunpack.c.l.b16 %v129
    %v516 = vunpack.c.l.b16 %v130
    %v517 = vunpack.c.l.b16 %v131
    %v518 = vunpack.c.l.b16 %v132
    %v519 = vunpack.c.l.b16 %v133
    %v520 = vunpack.c.l.b16 %v134
    %v521 = vunpack.c.l.b16 %v135
    %v522 = vunpack.c.l.b16 %v136
    %v523 = vunpack.c.l.b16 %v137
    %v524 = vunpack.c.l.b16 %v138
    %v525 = vunpack.c.l.b16 %v139
    %v526 = vunpack.c.l.b16 %v140
    %v527 = vunpack.c.l.b16 %v141
    %v528 = vunpack.c.l.b16 %v142
    %v529 = vunpack.c.l.b16 %v143
    %v530 = vunpack.c.l.b16 %v144
    %v531 = vunpack.c.l.b16 %v145
    %v532 = vunpack.c.l.b16 %v146
    %v533 = vunpack.c.l.b16 %v147
    %v534 = vunpack.c.l.b16 %v148
    %v535 = vunpack.c.l.b16 %v149
    %v536 = vunpack.c.l.b16 %v150
    %v537 = vunpack.c.l.b16 %v151
    %v538 = vunpack.c.l.b16 %v152
    %v539 = vunpack.c.l.b16 %v153
    %v540 = vunpack.c.l.b16 %v154
    %v541 = vunpack.c.l.b16 %v155
    %v542 = vunpack.c.l.b16 %v156
    %v543 = vunpack.c.l.b16 %v157
    %v544 = vunpack.c.l.b16 %v158
    %v545 = vunpack.c.l.b16 %v159
    %v546 = vunpack.c.l.b16 %v160
    %v547 = vunpack.c.l.b16 %v161
    %v548 = vunpack.c.l.b16 %v162
    %v549 = vunpack.c.l.b16 %v163
    %v550 = vunpack.c.l.b16 %v164
    %v551 = vunpack.c.l.b16 %v165
    %v552 = vunpack.c.l.b16 %v166
    %v553 = vunpack.c.l.b16 %v167
    %v554 = vunpack.c.l.b16 %v168
    %v555 = vunpack.c.l.b16 %v169
    %v556 = vunpack.c.l.b16 %v170
    %v557 = vunpack.c.l.b16 %v171
    %v558 = vunpack.c.l.b16 %v172
    %v559 = vunpack.c.l.b16 %v173
    %v560 = vunpack.c.l.b16 %v174
    %v561 = vunpack.c.l.b16 %v175
    %v562 = vpack.c.b16 %v433, %v432
    %v563 = vpack.c.b16 %v435, %v434
    %v564 = vpack.c.b16 %v437, %v436
    %v565 = vpack.c.b16 %v439, %v438
    %v566 = vpack.c.b16 %v441, %v440
    %v567 = vpack.c.b16 %v443, %v442
    %v568 = vpack.c.b16 %v445, %v444
    %v569 = vpack.c.b16 %v447, %v446
    %v570 = vpack.c.b16 %v449, %v448
    %v571 = vpack.c.b16 %v451, %v450
    %v572 = vpack.c.b16 %v453, %v452
    %v573 = vpack.c.b16 %v455, %v454
    %v574 = vpack.c.b16 %v457, %v456
    %v575 = vpack.c.b16 %v459, %v458
    %v576 = vpack.c.b16 %v461, %v460
    %v577 = vpack.c.b16 %v463, %v462
    %v578 = vpack.c.b16 %v465, %v464
    %v579 = vpack.c.b16 %v467, %v466
    %v580 = vpack.c.b16 %v469, %v468
    %v581 = vpack.c.b16 %v471, %v470
    %v582 = vpack.c.b16 %v473, %v472
    %v583 = vpack.c.b16 %v475, %v474
    %v584 = vpack.c.b16 %v477, %v476
    %v585 = vpack.c.b16 %v479, %v478
    %v586 = vpack.c.b16 %v481, %v480
    %v587 = vpack.c.b16 %v483, %v482
    %v588 = vpack.c.b16 %v485, %v484
    %v589 = vpack.c.b16 %v487, %v486
    %v590 = vpack.c.b16 %v489, %v488
    %v591 = vpack.c.b16 %v491, %v490
    %v592 = vpack.c.b16 %v493, %v492
    %v593 = vpack.c.b16 %v495, %v494
    %v594 = vpack.c.b16 %v497, %v496
    %v595 = vpack.c.b16 %v499, %v498
    %v596 = vpack.c.b16 %v501, %v500
    %v597 = vpack.c.b16 %v503, %v502
    %v598 = vpack.c.b16 %v505, %v504
    %v599 = vpack.c.b16 %v507, %v506
    %v600 = vpack.c.b16 %v509, %v508
    %v601 = vpack.c.b16 %v511, %v510
    %v602 = vpack.c.b16 %v513, %v512
    %v603 = vpack.c.b16 %v515, %v514
    %v604 = vpack.c.b16 %v517, %v516
    %v605 = vpack.c.b16 %v519, %v518
    %v606 = vpack.c.b16 %v521, %v520
    %v607 = vpack.c.b16 %v523, %v522
    %v608 = vpack.c.b16 %v525, %v524
    %v609 = vpack.c.b16 %v527, %v526
    %v610 = vpack.c.b16 %v529, %v528
    %v611 = vpack.c.b16 %v531, %v530
    %v612 = vpack.c.b16 %v533, %v532
    %v613 = vpack.c.b16 %v535, %v534
    %v614 = vpack.c.b16 %v537, %v536
    %v615 = vpack.c.b16 %v539, %v538
    %v616 = vpack.c.b16 %v541, %v540
    %v617 = vpack.c.b16 %v543, %v542
    %v618 = vpack.c.b16 %v545, %v544
    %v619 = vpack.c.b16 %v547, %v546
    %v620 = vpack.c.b16 %v549, %v548
    %v621 = vpack.c.b16 %v551, %v550
    %v622 = vpack.c.b16 %v553, %v552
    %v623 = vpack.c.b16 %v555, %v554
    %v624 = vpack.c.b16 %v557, %v556
    %v625 = vpack.c.b16 %v559, %v558
    %v626 = vpack.c.b16 %v561, %v560
    %vm691 = vcmask 89088
    %v693 = vsel %vm691, %v293, 0
    %vm695 = vcmask 1044480
    %vm696 = vcmask 1045504
    %v697 = vsel %vm695, 4294967295, 65535
    %v698 = vsel %vm696, %v697, 0
    %v700 = vand.u32 %v626, %v698
    %702 = vmatprep.subr.bf16.mxu0 0
    %703 = vmatpush1.bf16.msra.mxu0 %v562
    %704 = vmatprep.subr.bf16.mxu0 0
    %705 = vmatpush1.bf16.msra.mxu0 %v563
    %706 = vmatprep.subr.bf16.mxu0 0
    %707 = vmatpush1.bf16.msra.mxu0 %v564
    %708 = vmatprep.subr.bf16.mxu0 0
    %709 = vmatpush1.bf16.msra.mxu0 %v565
    %710 = vmatprep.subr.bf16.mxu0 0
    %711 = vmatpush1.bf16.msra.mxu0 %v566
    %712 = vmatprep.subr.bf16.mxu0 0
    %713 = vmatpush1.bf16.msra.mxu0 %v567
    %714 = vmatprep.subr.bf16.mxu0 0
    %715 = vmatpush1.bf16.msra.mxu0 %v568
    %716 = vmatprep.subr.bf16.mxu0 0
    %717 = vmatpush1.bf16.msra.mxu0 %v569
    %718 = vmatprep.subr.bf16.mxu0 0
    %719 = vmatpush1.bf16.msra.mxu0 %v570
    %720 = vmatprep.subr.bf16.mxu0 0
    %721 = vmatpush1.bf16.msra.mxu0 %v571
    %722 = vmatprep.subr.bf16.mxu0 0
    %723 = vmatpush1.bf16.msra.mxu0 %v572
    %724 = vmatprep.subr.bf16.mxu0 0
    %725 = vmatpush1.bf16.msra.mxu0 %v573
    %726 = vmatprep.subr.bf16.mxu0 0
    %727 = vmatpush1.bf16.msra.mxu0 %v574
    %728 = vmatprep.subr.bf16.mxu0 0
    %729 = vmatpush1.bf16.msra.mxu0 %v575
    %730 = vmatprep.subr.bf16.mxu0 0
    %731 = vmatpush1.bf16.msra.mxu0 %v576
    %732 = vmatprep.subr.bf16.mxu0 0
    %733 = vmatpush1.bf16.msra.mxu0 %v577
    %734 = vmatprep.mubr.bf16.mxu0 %v268
    %735 = vmatmul.mubr.bf16.gmra.mrb[0].mxu0 %v254
    %v736 = vpop.f32.mrb[0].mxu0
    %v737 = vadd.f32 %v224, %v736
    %v738 = vpop.f32.mrb[0].mxu0
    %v739 = vpop.f32.mrb[0].mxu0
    %v740 = vpop.f32.mrb[0].mxu0
    %741 = vdwg.mxu0
    %742 = vmatprep.subr.bf16.mxu0 0
    %743 = vmatpush1.bf16.msra.mxu0 %v578
    %744 = vmatprep.subr.bf16.mxu0 0
    %745 = vmatpush1.bf16.msra.mxu0 %v579
    %746 = vmatprep.subr.bf16.mxu0 0
    %747 = vmatpush1.bf16.msra.mxu0 %v580
    %748 = vmatprep.subr.bf16.mxu0 0
    %749 = vmatpush1.bf16.msra.mxu0 %v581
    %750 = vmatprep.subr.bf16.mxu0 0
    %751 = vmatpush1.bf16.msra.mxu0 %v582
    %752 = vmatprep.subr.bf16.mxu0 0
    %753 = vmatpush1.bf16.msra.mxu0 %v583
    %754 = vmatprep.subr.bf16.mxu0 0
    %755 = vmatpush1.bf16.msra.mxu0 %v584
    %756 = vmatprep.subr.bf16.mxu0 0
    %757 = vmatpush1.bf16.msra.mxu0 %v585
    %758 = vmatprep.subr.bf16.mxu0 0
    %759 = vmatpush1.bf16.msra.mxu0 %v586
    %760 = vmatprep.subr.bf16.mxu0 0
    %761 = vmatpush1.bf16.msra.mxu0 %v587
    %762 = vmatprep.subr.bf16.mxu0 0
    %763 = vmatpush1.bf16.msra.mxu0 %v588
    %764 = vmatprep.subr.bf16.mxu0 0
    %765 = vmatpush1.bf16.msra.mxu0 %v589
    %766 = vmatprep.subr.bf16.mxu0 0
    %767 = vmatpush1.bf16.msra.mxu0 %v590
    %768 = vmatprep.subr.bf16.mxu0 0
    %769 = vmatpush1.bf16.msra.mxu0 %v591
    %770 = vmatprep.subr.bf16.mxu0 0
    %771 = vmatpush1.bf16.msra.mxu0 %v592
    %772 = vmatprep.subr.bf16.mxu0 0
    %773 = vmatpush1.bf16.msra.mxu0 %v593
    %774 = vmatprep.mubr.bf16.mxu0 %v278
    %775 = vmatmul.mubr.bf16.gmra.mrb[0].mxu0 %v276
    %v776 = vpop.f32.mrb[0].mxu0
    %v777 = vadd.f32 %v737, %v776
    %v778 = vpop.f32.mrb[0].mxu0
    %v779 = vpop.f32.mrb[0].mxu0
    %v780 = vpop.f32.mrb[0].mxu0
    %781 = vdwg.mxu0
    %782 = vmatprep.subr.bf16.mxu0 0
    %783 = vmatpush1.bf16.msra.mxu0 %v594
    %784 = vmatprep.subr.bf16.mxu0 0
    %785 = vmatpush1.bf16.msra.mxu0 %v595
    %786 = vmatprep.subr.bf16.mxu0 0
    %787 = vmatpush1.bf16.msra.mxu0 %v596
    %788 = vmatprep.subr.bf16.mxu0 0
    %789 = vmatpush1.bf16.msra.mxu0 %v597
    %790 = vmatprep.subr.bf16.mxu0 0
    %791 = vmatpush1.bf16.msra.mxu0 %v598
    %792 = vmatprep.subr.bf16.mxu0 0
    %793 = vmatpush1.bf16.msra.mxu0 %v599
    %794 = vmatprep.subr.bf16.mxu0 0
    %795 = vmatpush1.bf16.msra.mxu0 %v600
    %796 = vmatprep.subr.bf16.mxu0 0
    %797 = vmatpush1.bf16.msra.mxu0 %v601
    %798 = vmatprep.subr.bf16.mxu0 0
    %799 = vmatpush1.bf16.msra.mxu0 %v602
    %800 = vmatprep.subr.bf16.mxu0 0
    %801 = vmatpush1.bf16.msra.mxu0 %v603
    %802 = vmatprep.subr.bf16.mxu0 0
    %803 = vmatpush1.bf16.msra.mxu0 %v604
    %804 = vmatprep.subr.bf16.mxu0 0
    %805 = vmatpush1.bf16.msra.mxu0 %v605
    %806 = vmatprep.subr.bf16.mxu0 0
    %807 = vmatpush1.bf16.msra.mxu0 %v606
    %808 = vmatprep.subr.bf16.mxu0 0
    %809 = vmatpush1.bf16.msra.mxu0 %v607
    %810 = vmatprep.subr.bf16.mxu0 0
    %811 = vmatpush1.bf16.msra.mxu0 %v608
    %812 = vmatprep.subr.bf16.mxu0 0
    %813 = vmatpush1.bf16.msra.mxu0 %v609
    %814 = vmatprep.mubr.bf16.mxu0 %v275
    %815 = vmatmul.mubr.bf16.gmra.mrb[0].mxu0 %v261
    %v816 = vpop.f32.mrb[0].mxu0
    %v817 = vadd.f32 %v777, %v816
    %v818 = vpop.f32.mrb[0].mxu0
    %v819 = vpop.f32.mrb[0].mxu0
    %v820 = vpop.f32.mrb[0].mxu0
    %821 = vdwg.mxu0
    %822 = vmatprep.subr.bf16.mxu0 0
    %823 = vmatpush1.bf16.msra.mxu0 %v610
    %824 = vmatprep.subr.bf16.mxu0 0
    %825 = vmatpush1.bf16.msra.mxu0 %v611
    %826 = vmatprep.subr.bf16.mxu0 0
    %827 = vmatpush1.bf16.msra.mxu0 %v612
    %828 = vmatprep.subr.bf16.mxu0 0
    %829 = vmatpush1.bf16.msra.mxu0 %v613
    %830 = vmatprep.subr.bf16.mxu0 0
    %831 = vmatpush1.bf16.msra.mxu0 %v614
    %832 = vmatprep.subr.bf16.mxu0 0
    %833 = vmatpush1.bf16.msra.mxu0 %v615
    %834 = vmatprep.subr.bf16.mxu0 0
    %835 = vmatpush1.bf16.msra.mxu0 %v616
    %836 = vmatprep.subr.bf16.mxu0 0
    %837 = vmatpush1.bf16.msra.mxu0 %v617
    %838 = vmatprep.subr.bf16.mxu0 0
    %839 = vmatpush1.bf16.msra.mxu0 %v618
    %840 = vmatprep.subr.bf16.mxu0 0
    %841 = vmatpush1.bf16.msra.mxu0 %v619
    %842 = vmatprep.subr.bf16.mxu0 0
    %843 = vmatpush1.bf16.msra.mxu0 %v620
    %844 = vmatprep.subr.bf16.mxu0 0
    %845 = vmatpush1.bf16.msra.mxu0 %v621
    %846 = vmatprep.subr.bf16.mxu0 0
    %847 = vmatpush1.bf16.msra.mxu0 %v622
    %848 = vmatprep.subr.bf16.mxu0 0
    %849 = vmatpush1.bf16.msra.mxu0 %v623
    %850 = vmatprep.subr.bf16.mxu0 0
    %851 = vmatpush1.bf16.msra.mxu0 %v624
    %852 = vmatprep.subr.bf16.mxu0 0
    %853 = vmatpush1.bf16.msra.mxu0 %v625
    %854 = vmatprep.mubr.bf16.mxu0 %v279
    %855 = vmatmul.mubr.bf16.gmra.mrb[0].mxu0 %v277
    %v856 = vpop.f32.mrb[0].mxu0
    %v857 = vadd.f32 %v817, %v856
    %v858 = vpop.f32.mrb[0].mxu0
    %v859 = vpop.f32.mrb[0].mxu0
    %v860 = vpop.f32.mrb[0].mxu0
    %861 = vdwg.mxu0
    %862 = vmatprep.subr.bf16.mxu0 0
    %863 = vmatpush1.bf16.msra.mxu0 %v700
    %864 = vmatprep.subr.bf16.mxu0 0
    %865 = vmatpush1.bf16.msra.mxu0 0
    %866 = vmatprep.subr.bf16.mxu0 0
    %867 = vmatpush1.bf16.msra.mxu0 0
    %868 = vmatprep.subr.bf16.mxu0 0
    %869 = vmatpush1.bf16.msra.mxu0 0
    %870 = vmatprep.subr.bf16.mxu0 0
    %871 = vmatpush1.bf16.msra.mxu0 0
    %872 = vmatprep.subr.bf16.mxu0 0
    %873 = vmatpush1.bf16.msra.mxu0 0
    %874 = vmatprep.subr.bf16.mxu0 0
    %875 = vmatpush1.bf16.msra.mxu0 0
    %876 = vmatprep.subr.bf16.mxu0 0
    %877 = vmatpush1.bf16.msra.mxu0 0
    %878 = vmatprep.subr.bf16.mxu0 0
    %879 = vmatpush1.bf16.msra.mxu0 0
    %880 = vmatprep.subr.bf16.mxu0 0
    %881 = vmatpush1.bf16.msra.mxu0 0
    %882 = vmatprep.subr.bf16.mxu0 0
    %883 = vmatpush1.bf16.msra.mxu0 0
    %884 = vmatprep.subr.bf16.mxu0 0
    %885 = vmatpush1.bf16.msra.mxu0 0
    %886 = vmatprep.subr.bf16.mxu0 0
    %887 = vmatpush1.bf16.msra.mxu0 0
    %888 = vmatprep.subr.bf16.mxu0 0
    %889 = vmatpush1.bf16.msra.mxu0 0
    %890 = vmatprep.subr.bf16.mxu0 0
    %891 = vmatpush1.bf16.msra.mxu0 0
    %892 = vmatprep.subr.bf16.mxu0 0
    %893 = vmatpush1.bf16.msra.mxu0 0
    %894 = vmatprep.mubr.bf16.mxu0 0
    %895 = vmatmul.mubr.bf16.gmra.mrb[0].mxu0 %v693
    %v896 = vpop.f32.mrb[0].mxu0
    %v897 = vadd.f32 %v857, %v896
    %v898 = vpop.f32.mrb[0].mxu0
    %v899 = vpop.f32.mrb[0].mxu0
    %v900 = vpop.f32.mrb[0].mxu0
    %901 = vdwg.mxu0
    %v902 = vld [vmem:[%s4] sm:$0x1]
    %v904 = vlaneseq
    %v905 = vshrl.u32 %v904, 7
    %v906 = vsub.s32 0, %v905
    %v907 = vrot.slane %v902, %v906
    %v909 = vadd.f32 %v897, %v907
    %v910 = vmax.f32 %v909, 0.0
    %v911 = vld [vmem:[%s5] sm:$0xff]
    %v912 = vld [vmem:[%s5 + $0x8] sm:$0xff]
    %v913 = vld [vmem:[%s5 + $0x10] sm:$0xff]
    %v914 = vld [vmem:[%s5 + $0x18] sm:$0xff]
    %v915 = vld [vmem:[%s5 + $0x20] sm:$0xff]
    %v916 = vld [vmem:[%s5 + $0x28] sm:$0xff]
    %v917 = vld [vmem:[%s5 + $0x30] sm:$0xff]
    %v918 = vld [vmem:[%s5 + $0x38] sm:$0xff]
    %v919 = vld [vmem:[%s5 + $0x40] sm:$0xff]
    %v920 = vld [vmem:[%s5 + $0x48] sm:$0xff]
    %v921 = vld [vmem:[%s5 + $0x50] sm:$0xff]
    %v922 = vld [vmem:[%s5 + $0x58] sm:$0xff]
    %v923 = vld [vmem:[%s5 + $0x60] sm:$0xff]
    %v924 = vld [vmem:[%s5 + $0x68] sm:$0xff]
    %v925 = vld [vmem:[%s5 + $0x70] sm:$0xff]
    %v926 = vld [vmem:[%s5 + $0x78] sm:$0xff]
    %v927 = vld [vmem:[#allocation2] sm:$0x1]
    %v929 = vlaneseq
    %v930 = vshrl.u32 %v929, 7
    %v931 = vsub.s32 0, %v930
    %v932 = vrot.slane %v927, %v931
    %934 = vmatprep.subr.mxu0 0.0
    %935 = vmatpush1.msra.mxu0 %v911
    %936 = vmatprep.subr.mxu0 0.0
    %937 = vmatpush1.msra.mxu0 %v912
    %938 = vmatprep.subr.mxu0 0.0
    %939 = vmatpush1.msra.mxu0 %v913
    %940 = vmatprep.subr.mxu0 0.0
    %941 = vmatpush1.msra.mxu0 %v914
    %942 = vmatprep.subr.mxu0 0.0
    %943 = vmatpush1.msra.mxu0 %v915
    %944 = vmatprep.subr.mxu0 0.0
    %945 = vmatpush1.msra.mxu0 %v916
    %946 = vmatprep.subr.mxu0 0.0
    %947 = vmatpush1.msra.mxu0 %v917
    %948 = vmatprep.subr.mxu0 0.0
    %949 = vmatpush1.msra.mxu0 %v918
    %950 = vmatprep.subr.mxu0 0.0
    %951 = vmatpush1.msra.mxu0 %v919
    %952 = vmatprep.subr.mxu0 0.0
    %953 = vmatpush1.msra.mxu0 %v920
    %954 = vmatprep.subr.mxu0 0.0
    %955 = vmatpush1.msra.mxu0 %v921
    %956 = vmatprep.subr.mxu0 0.0
    %957 = vmatpush1.msra.mxu0 %v922
    %958 = vmatprep.subr.mxu0 0.0
    %959 = vmatpush1.msra.mxu0 %v923
    %960 = vmatprep.subr.mxu0 0.0
    %961 = vmatpush1.msra.mxu0 %v924
    %962 = vmatprep.subr.mxu0 0.0
    %963 = vmatpush1.msra.mxu0 %v925
    %964 = vmatprep.subr.mxu0 0.0
    %965 = vmatpush1.msra.mxu0 %v926
    %966 = vmatprep.subr.mxu0 0.0
    %967 = vmatpush1.msra.mxu0 0.0
    %968 = vmatprep.subr.mxu0 0.0
    %969 = vmatpush1.msra.mxu0 0.0
    %970 = vmatprep.subr.mxu0 0.0
    %971 = vmatpush1.msra.mxu0 0.0
    %972 = vmatprep.subr.mxu0 0.0
    %973 = vmatpush1.msra.mxu0 0.0
    %974 = vmatprep.subr.mxu0 0.0
    %975 = vmatpush1.msra.mxu0 0.0
    %976 = vmatprep.subr.mxu0 0.0
    %977 = vmatpush1.msra.mxu0 0.0
    %978 = vmatprep.subr.mxu0 0.0
    %979 = vmatpush1.msra.mxu0 0.0
    %980 = vmatprep.subr.mxu0 0.0
    %981 = vmatpush1.msra.mxu0 0.0
    %982 = vmatprep.subr.mxu0 0.0
    %983 = vmatpush1.msra.mxu0 0.0
    %984 = vmatprep.subr.mxu0 0.0
    %985 = vmatpush1.msra.mxu0 0.0
    %986 = vmatprep.subr.mxu0 0.0
    %987 = vmatpush1.msra.mxu0 0.0
    %988 = vmatprep.subr.mxu0 0.0
    %989 = vmatpush1.msra.mxu0 0.0
    %990 = vmatprep.subr.mxu0 0.0
    %991 = vmatpush1.msra.mxu0 0.0
    %992 = vmatprep.subr.mxu0 0.0
    %993 = vmatpush1.msra.mxu0 0.0
    %994 = vmatprep.subr.mxu0 0.0
    %995 = vmatpush1.msra.mxu0 0.0
    %996 = vmatprep.subr.mxu0 0.0
    %997 = vmatpush1.msra.mxu0 0.0
    %998 = vmatprep.mubr.f32.mxu0 0.0
    %999 = vmatmul.mubr.f32.gmra.mrb[0].mxu0 %v910
    %v1000 = vpop.f32.mrb[0].mxu0
    %v1001 = vadd.f32 %v932, %v1000
    %v1002 = vpop.f32.mrb[0].mxu0
    %1003 = vdwg.mxu0
    %v1004 = vxor.u32 %v1001, 2147483648
    %v1005 = vmul.f32 %v1004, 1.442695
    %v1006 = vpow.pop %v1005
    %v1007 = vadd.f32 %v1006, 1.0
    %v1008 = vrcp.pop %v1007
    %v1009 = vmul.f32 1.0, %v1008
    %v1010 = vlaneseq
    %v1011 = vand.u32 %v1010, 127
    %vm1012 = vcmp.eq.s32.totalorder %v1011, 0
    %v1013 = vsub.f32 1.0, %v1009
    %1015 = vset.pattern.permute.xlu0 0
    %1016 = vperm.xlu0 %1015, %v1009
    %v1017 = vpop.permute.xlu0 %1016
    %1020 = vset.pattern.permute.xlu0 0
    %1021 = vperm.xlu0 %1020, %v1013
    %v1022 = vpop.permute.xlu0 %1021
    %v1024 = vsel %vm1012, %v1017, %v1022
    %vm1025 = vcmask 9216
    %1026 = vst.msk [vmem:[#allocation6] sm:$0x3] %vm1025, %v1024
    // Predicated region
    $region34: #{wide_deep_cnn.1} parent=1 // pred_check
      _
    $region35: #{wide_deep_cnn.1} parent=1 // pred_check_branch
      %1028 = sbr.rel (0) target = $region37
    $region36: #{wide_deep_cnn.1} parent=1 // pred_region
      %s1030 = ssub.s32 32, 32
      %1031 = vsyncadd [#allocation5], %s1030
      %s1033 = sshll.u32 [#allocation6], 4
      %s1034 = int_to_ptr.vmem [resolvable:$true] %s1033
      %1036 = dma.vmem_to_hbm [thread:$0]  %s1034, 32, %s7, [#allocation5]
    $region37: #{wide_deep_cnn.1} parent=1 // pred_fallthru
      _
    // Predicated region
    $region38: #{wide_deep_cnn.1} parent=1 // pred_check
      _
    $region39: #{wide_deep_cnn.1} parent=1 // pred_check_branch
      %1038 = sbr.rel (0) target = $region41
    $region40: #{wide_deep_cnn.1} parent=1 // pred_region
      %1039 = dma.done [#allocation5], 32
    $region41: #{wide_deep_cnn.1} parent=1 // pred_fallthru
      _
    %1040 = vsyncpa [#allocation4], 1
    %1041 = vsyncpa [#allocation5], 1

</llo_original>
